<compile_context>
chip_gen: v7x
topology: tpu7x:2x2x1
jax: 0.10.0
libtpu: 0.0.40
codegen_flags: <defaults>
</compile_context>

<pallas_src>
import numpy as np
import jax
import jax.numpy as jnp
from jax.experimental import pallas as pl
from jax.experimental.pallas import tpu as pltpu


def _round_up(x, m):
    return (x + m - 1) // m * m


def _vmem_capacity_bytes():
    """Physical VMEM of the current TPU generation (fallback: v7x's 64 MiB)."""
    try:
        info = pltpu.get_tpu_info()
        for attr in ("vmem_capacity_bytes", "vmem_size_bytes", "vmem_bytes"):
            v = getattr(info, attr, None)
            if v:
                return int(v)
    except Exception:
        pass
    return 64 * 2**20


def _conv_ds_kernel(x_ref, w_ref, b_ref, o_ref):
    """Fused 3x3 stride-2 conv + bias + ReLU for one (n, ho-block) tile.

    x_ref : (1, T, Wt1, K3) bf16 -- the three kh row-taps (even / odd / even+1
            padded rows) lane-concatenated; W pair-packed so each sublane holds
            the two input columns belonging to one output column.
    w_ref : (2, K3, Co)    bf16 -- one weight slab per kw pair-shift (s = 0/1).
    b_ref : (1, Co)        f32
    o_ref : (1, T, Wt1, Co)     -- lane-dense; columns >= Wo are junk and are
            sliced off in the wrapper.
    """
    _, t, wt1, k3 = x_ref.shape
    co = o_ref.shape[-1]
    m = t * wt1

    # Full contiguous view (Wt1 % 8 == 0 -> this reshape is a layout no-op).
    a0 = x_ref[...].reshape(m, k3)

    acc = jnp.dot(a0, w_ref[0], preferred_element_type=jnp.float32)   # s = 0 taps
    p1 = jnp.dot(a0, w_ref[1], preferred_element_type=jnp.float32)    # s = 1 taps
    # Output column wo needs the kw=2 contribution of input pair wo+1:
    # roll(A,-1) @ W == roll(A @ W, -1), so shift the (smaller, f32) partial
    # product up one sublane instead of the bf16 operand.  pltpu.roll matches
    # jnp.roll, so shift = m-1 == shift -1.  The wrapped / cross-T-row elements
    # only ever land in the junk output columns (>= Wo).
    acc = acc + pltpu.roll(p1, m - 1, 0)
    acc = acc + b_ref[...]                       # f32 bias broadcast (no zero-init)
    o_ref[...] = jnp.maximum(acc, 0.0).reshape(1, t, wt1, co).astype(o_ref.dtype)


def downsample_forward(x_nchw, weight, bias, *, stride=2, padding=1,
                       target_rows=512, compute_dtype=jnp.bfloat16,
                       out_dtype=None):
    """F.relu(Conv2d(k=3, stride=2, padding=1)(x)).  x_nchw: (N, Cin, H, W).

    out_dtype=None keeps the module's dtype (x.dtype); pass jnp.bfloat16 when
    the downstream model runs in bf16 to halve output HBM writes.
    """
    N, Cin, H, W = x_nchw.shape
    Cout, _, KH, KW = weight.shape
    assert (KH, KW, stride, padding) == (3, 3, 2, 1), "specialized for k=3,s=2,p=1"
    Ho = (H + 2 * padding - KH) // stride + 1
    Wo = (W + 2 * padding - KW) // stride + 1
    out_dtype = x_nchw.dtype if out_dtype is None else out_dtype

    Cin_p = _round_up(Cin, 64)          # per-row-tap packed lanes = 2*Cin_p (mult of 128)
    c2 = 2 * Cin_p
    K3 = 3 * c2                         # full MXU contraction depth (>= 384)
    Cout_p = _round_up(Cout, 128)       # lane-dense stores
    Wt1 = _round_up(Wo + 1, 8)          # pairs per row == padded output width

    # ---- generation-aware tile / VMEM sizing --------------------------------
    vmem_cap = _vmem_capacity_bytes()                 # 64 MiB v7x, 128 MiB v5e/v6e
    budget = int(0.70 * vmem_cap)                     # pipeline + weights + temps
    vmem_limit = int(min(budget + 16 * 2**20, max(vmem_cap - 8 * 2**20, 32 * 2**20)))
    out_b = jnp.dtype(out_dtype).itemsize

    def _vmem_need(t):
        m = t * Wt1
        ins = 2 * m * K3 * 2                       # input tile, double-buffered, bf16
        outs = 2 * m * Cout_p * out_b              # output tile, double-buffered
        wgt = 2 * K3 * Cout_p * 2 + Cout_p * 4     # single-buffered weights + bias
        tmp = 2 * m * Cout_p * 4                   # f32 partial products / acc
        return ins + outs + wgt + tmp + (1 << 20)  # slack

    tile_ho = max(1, min(Ho, target_rows // Wt1))
    while tile_ho > 1 and _vmem_need(tile_ho) > budget:
        tile_ho = max(1, tile_ho // 2)
    # >= 2 grid steps: feeds both v7x TensorCores and gives the DMA pipeline overlap.
    while tile_ho > 1 and N * pl.cdiv(Ho, tile_ho) < 2:
        tile_ho = pl.cdiv(tile_ho, 2)
    Ho_p = _round_up(Ho, tile_ho)

    # ---- relayout (one fused pass under jit): NCHW->NHWC bf16, pad, ---------
    # ---- pair-pack W into lanes, parity-split H, lane-concat the kh taps ----
    x = jnp.transpose(x_nchw, (0, 2, 3, 1)).astype(compute_dtype)
    Hp = 2 * Ho_p + 2
    Wp = 2 * Wt1
    x = jnp.pad(x, ((0, 0),
                    (padding, Hp - H - padding),
                    (padding, Wp - W - padding),
                    (0, Cin_p - Cin)))
    x = x.reshape(N, Hp, Wt1, c2)                 # adjacent cols packed into lanes
    x_even = x[:, 0::2]                           # (N, Ho_p+1, Wt1, c2)
    x_taps = jnp.concatenate(
        [x_even[:, :Ho_p],                        # kh = 0 : padded row 2*ho
         x[:, 1::2][:, :Ho_p],                    # kh = 1 : padded row 2*ho + 1
         x_even[:, 1:Ho_p + 1]],                  # kh = 2 : padded row 2*ho + 2
        axis=-1)                                  # (N, Ho_p, Wt1, K3)
    # TODO(synk): kh=0/kh=2 duplicate the even-row stream (~0.5x input HBM); a
    # +1-row halo block (element-offset index_map or manual DMA) would remove it.

    # ---- weights: PyTorch (Cout, Cin, 3, 3) -> (2, K3, Cout_p) kw-shift slabs
    w_t = jnp.transpose(weight, (2, 3, 1, 0)).astype(jnp.float32)   # (3,3,Cin,Cout)
    wk = jnp.zeros((2, K3, Cout_p), jnp.float32)
    for kh in range(3):
        base = kh * c2
        wk = wk.at[0, base:base + Cin, :Cout].set(w_t[kh, 0])                    # kw=0
        wk = wk.at[0, base + Cin_p:base + Cin_p + Cin, :Cout].set(w_t[kh, 1])    # kw=1
        wk = wk.at[1, base:base + Cin, :Cout].set(w_t[kh, 2])                    # kw=2
    wk = wk.astype(compute_dtype)
    b_p = jnp.zeros((1, Cout_p), jnp.float32).at[0, :Cout].set(
        bias.astype(jnp.float32))

    grid = (N, Ho_p // tile_ho)
    out = pl.pallas_call(
        _conv_ds_kernel,
        out_shape=jax.ShapeDtypeStruct((N, Ho_p, Wt1, Cout_p), out_dtype),
        grid_spec=pltpu.PrefetchScalarGridSpec(
            num_scalar_prefetch=0,
            grid=grid,
            in_specs=[
                pl.BlockSpec((1, tile_ho, Wt1, K3), lambda n, i: (n, i, 0, 0)),
                # constant index maps -> single-buffer the weight slab and bias
                pl.BlockSpec((2, K3, Cout_p), lambda n, i: (0, 0, 0),
                             pipeline_mode=pl.Buffered(buffer_count=1)),
                pl.BlockSpec((1, Cout_p), lambda n, i: (0, 0),
                             pipeline_mode=pl.Buffered(buffer_count=1)),
            ],
            out_specs=pl.BlockSpec((1, tile_ho, Wt1, Cout_p),
                                   lambda n, i: (n, i, 0, 0)),
        ),
        compiler_params=pltpu.CompilerParams(
            dimension_semantics=("parallel", "parallel"),
            vmem_limit_bytes=vmem_limit,
        ),
    )(x_taps, wk, b_p)

    # slice off spatial / channel padding, back to the module's NCHW layout
    out = out[:, :Ho, :Wo, :Cout]
    # TODO(synk): if the surrounding model consumes NHWC activations, return
    # `out` directly (and pass out_dtype=bf16) to skip this transpose pass.
    return jnp.transpose(out, (0, 3, 1, 2))


if __name__ == "__main__":
    key = jax.random.PRNGKey(0)
    k_x, k_w, k_b = jax.random.split(key, 3)

    # small shapes consistent with the module
    N, Cin, H, W = 2, 4, 16, 16
    Cout, KH, KW = 8, 3, 3

    x = jax.random.normal(k_x, (N, Cin, H, W), dtype=jnp.float32)
    fan_in = Cin * KH * KW
    bound = 1.0 / np.sqrt(fan_in)
    weight = jax.random.uniform(k_w, (Cout, Cin, KH, KW), jnp.float32, -bound, bound)
    bias = jax.random.uniform(k_b, (Cout,), jnp.float32, -bound, bound)

    fwd = jax.jit(downsample_forward)     # lets XLA fuse the relayout glue passes
    y = jax.block_until_ready(fwd(x, weight, bias))

    # reference: F.relu(conv(x)) in f32 via XLA conv
    y_ref = jax.lax.conv_general_dilated(
        x, weight, window_strides=(2, 2), padding=((1, 1), (1, 1)),
        dimension_numbers=("NCHW", "OIHW", "NCHW"),
    ) + bias.reshape(1, Cout, 1, 1)
    y_ref = jnp.maximum(y_ref, 0.0)
    # kernel uses bf16 MXU operands with f32 accumulation -> bf16-level tolerance
    np.testing.assert_allclose(np.asarray(y), np.asarray(y_ref), rtol=3e-2, atol=3e-2)

    print("KERNEL_OK")
</pallas_src>

<mosaic_0001>
module attributes {stable_mosaic.version = 11 : i64} {
  func.func @_conv_ds_kernel(%arg0: i32, %arg1: i32, %arg2: memref<1x8x16x384xbf16, #tpu.memory_space<vmem>>, %arg3: memref<2x384x128xbf16, #tpu.memory_space<vmem>>, %arg4: memref<1x128xf32, #tpu.memory_space<vmem>>, %arg5: memref<1x8x16x128xf32, #tpu.memory_space<vmem>>) attributes {dimension_semantics = [#tpu.dimension_semantics<parallel>, #tpu.dimension_semantics<parallel>], iteration_bounds = array<i64: 2, 1>, scalar_prefetch = 0 : i64, scratch_operands = 0 : i64, tpu.core_type = #tpu.core_type<tc>, window_params = [{transform_indices = @transform_0, window_bounds = array<i64: 1, 8, 16, 384>}, {pipeline_mode = #tpu.pipeline_mode<synchronous>, transform_indices = @transform_1, window_bounds = array<i64: 2, 384, 128>}, {pipeline_mode = #tpu.pipeline_mode<synchronous>, transform_indices = @transform_2, window_bounds = array<i64: 1, 128>}, {transform_indices = @transform_3, window_bounds = array<i64: 1, 8, 16, 128>}]} {
    %c0 = arith.constant 0 : index
    %c0_0 = arith.constant 0 : index
    %c0_1 = arith.constant 0 : index
    %c0_2 = arith.constant 0 : index
    %0 = vector.load %arg2[%c0, %c0_0, %c0_1, %c0_2] : memref<1x8x16x384xbf16, #tpu.memory_space<vmem>>, vector<1x8x16x384xbf16>
    %1 = vector.shape_cast %0 : vector<1x8x16x384xbf16> to vector<128x384xbf16>
    %c0_3 = arith.constant 0 : index
    %c0_4 = arith.constant 0 : index
    %c0_5 = arith.constant 0 : index
    %2 = vector.load %arg3[%c0_3, %c0_4, %c0_5] : memref<2x384x128xbf16, #tpu.memory_space<vmem>>, vector<1x384x128xbf16>
    %3 = vector.shape_cast %2 : vector<1x384x128xbf16> to vector<384x128xbf16>
    %cst = arith.constant dense<0.000000e+00> : vector<128x128xf32>
    %4 = tpu.matmul %1, %3, %cst {dimension_numbers = #tpu.dot_dimension_numbers<[1], [0], [0], [1], [0, 0, 1, 1], [], []>} : vector<128x384xbf16>, vector<384x128xbf16>, vector<128x128xf32> -> vector<128x128xf32>
    %c1 = arith.constant 1 : index
    %c0_6 = arith.constant 0 : index
    %c0_7 = arith.constant 0 : index
    %5 = vector.load %arg3[%c1, %c0_6, %c0_7] : memref<2x384x128xbf16, #tpu.memory_space<vmem>>, vector<1x384x128xbf16>
    %6 = vector.shape_cast %5 : vector<1x384x128xbf16> to vector<384x128xbf16>
    %cst_8 = arith.constant dense<0.000000e+00> : vector<128x128xf32>
    %7 = tpu.matmul %1, %6, %cst_8 {dimension_numbers = #tpu.dot_dimension_numbers<[1], [0], [0], [1], [0, 0, 1, 1], [], []>} : vector<128x384xbf16>, vector<384x128xbf16>, vector<128x128xf32> -> vector<128x128xf32>
    %c127_i32 = arith.constant 127 : i32
    %8 = tpu.dynamic_rotate %7 by %c127_i32 dim 0 : vector<128x128xf32>, i32 -> vector<128x128xf32>
    %9 = arith.addf %4, %8 : vector<128x128xf32>
    %c0_9 = arith.constant 0 : index
    %c0_10 = arith.constant 0 : index
    %10 = vector.load %arg4[%c0_9, %c0_10] : memref<1x128xf32, #tpu.memory_space<vmem>>, vector<1x128xf32>
    %11 = vector.broadcast %10 : vector<1x128xf32> to vector<128x128xf32>
    %12 = arith.addf %9, %11 : vector<128x128xf32>
    %cst_11 = arith.constant 0.000000e+00 : f32
    %13 = vector.broadcast %cst_11 : f32 to vector<128x128xf32>
    %14 = arith.maximumf %12, %13 : vector<128x128xf32>
    %15 = vector.shape_cast %14 : vector<128x128xf32> to vector<1x8x16x128xf32>
    %c0_12 = arith.constant 0 : index
    %c0_13 = arith.constant 0 : index
    %c0_14 = arith.constant 0 : index
    %c0_15 = arith.constant 0 : index
    %16 = vector.load %arg5[%c0_12, %c0_13, %c0_14, %c0_15] : memref<1x8x16x128xf32, #tpu.memory_space<vmem>>, vector<1x8x16x128xf32>
    tpu.vector_store %arg5[%c0_12, %c0_13, %c0_14, %c0_15], %15 {strides = array<i32>} : memref<1x8x16x128xf32, #tpu.memory_space<vmem>>, vector<1x8x16x128xf32>,
    return
  }
  func.func @transform_0(%arg0: i32, %arg1: i32) -> (i32, i32, i32, i32) {
    %c0_i32 = arith.constant 0 : i32
    %c0_i32_0 = arith.constant 0 : i32
    %c0_i32_1 = arith.constant 0 : i32
    return %arg0, %arg1, %c0_i32, %c0_i32_0 : i32, i32, i32, i32
  }
  func.func @transform_1(%arg0: i32, %arg1: i32) -> (i32, i32, i32) {
    %c0_i32 = arith.constant 0 : i32
    %c0_i32_0 = arith.constant 0 : i32
    %c0_i32_1 = arith.constant 0 : i32
    %c0_i32_2 = arith.constant 0 : i32
    return %c0_i32, %c0_i32_0, %c0_i32_1 : i32, i32, i32
  }
  func.func @transform_2(%arg0: i32, %arg1: i32) -> (i32, i32) {
    %c0_i32 = arith.constant 0 : i32
    %c0_i32_0 = arith.constant 0 : i32
    %c0_i32_1 = arith.constant 0 : i32
    return %c0_i32, %c0_i32_0 : i32, i32
  }
  func.func @transform_3(%arg0: i32, %arg1: i32) -> (i32, i32, i32, i32) {
    %c0_i32 = arith.constant 0 : i32
    %c0_i32_0 = arith.constant 0 : i32
    %c0_i32_1 = arith.constant 0 : i32
    return %arg0, %arg1, %c0_i32, %c0_i32_0 : i32, i32, i32, i32
  }
}

</mosaic_0001>

<llo_original>
// kernel: downsample_forward.1
$region0: #{downsample_forward.1}
  #allocation0 [shape = 'u32[]', space=smem, size = 0x4, offset = 0x4, fixed_abs, tag = 'smem constant byte address 0x4 - core index']
  #allocation1 [shape = 'u32[144,128]{1,0:T(1,128)}', space=vmem, size = 0x12000, scoped, tag = 'internal scratch']
  %s0 = inlined_call_operand.vmem [shape: bf16[2,8,16,384], index: 0, kind: input, shape index: {}]
  %s1 = inlined_call_operand.vmem [shape: bf16[2,384,128], index: 1, kind: input, shape index: {}]
  %s2 = inlined_call_operand.vmem [shape: f32[1,128], index: 2, kind: input, shape index: {}]
  %s3 = inlined_call_operand.vmem [shape: f32[2,8,16,128], index: 3, kind: output, shape index: {}]
  %s4 = sld [smem:[#allocation0]]
  $region45: #{downsample_forward.1} parent=0
    _
  %s6 = ssub.s32 1, %s4
  %s7 = scalar_select 0, %s6, %s4
  loop: start=0, step=1, limit=4
  $region2: #{downsample_forward.1} parent=0 // loop_pre_header
    _
  $region3: #{downsample_forward.1} parent=0 // loop_header
    %s9 = sphi 0, %s13
    %p10 = scmp.ge.s32.totalorder %s9, 4
    %s16 = sphi 0, %s28
    %s17 = sphi 0, %s24
    %s18 = sphi 0, %s16
    %s19 = sphi 0, %s17
    %s20 = sphi 0, %s18
    %s21 = sphi 0, %s19
    %s33 = sphi 0, %s35
    %s36 = sphi 0, %s33
    %s37 = sphi 0, %s36
    %s53 = sphi 0, %s37
    %s57 = sphi 0, %s57
    %s59 = sphi 0, %s57
    %s60 = sphi 0, %s59
    %s74 = sphi 0, %s60
    %s78 = sphi 0, %s78
    %s80 = sphi 0, %s78
    %s81 = sphi 0, %s80
    %s95 = sphi 0, %s81
    %s103 = sphi 0, %s105
    %s106 = sphi 0, %s103
    %s107 = sphi 0, %s106
    %s123 = sphi 0, %s107
  $region4: #{downsample_forward.1} parent=0 // loop_header_branch
    %12 = sbr.rel (%p10) target = $region8
  $region5: #{downsample_forward.1} parent=0 // loop_body
    %s14 = ssub.s32 %s9, 1
    %s15 = ssub.s32 %s9, 2
    %s22 = sadd.s32 1, %s17
    %p23 = scmp.ge.s32.totalorder %s22, 1
    %s24 = scalar_select %p23, 0, %s22
    %s25 = sadd.s32 1, %s16
    %s26 = scalar_select %p23, %s25, %s16
    %p27 = scmp.ge.s32.totalorder %s26, 2
    %s28 = scalar_select %p27, 0, %s26
    %s29 = ssub.s32 %s16, %s28
    %s30 = ssub.s32 %s17, %s24
    %s31 = sor.u32 %s29, %s30
    %p32 = scmp.eq.s32.totalorder %s31, 0
    %s34 = sadd.s32 %s33, 1
    %s35 = scalar_select %p32, %s33, %s34
    %p38 = pneg %p32
    %p39 = scmp.eq.s32.totalorder %s9, 1
    %p40 = por %p38, %p39
    %p41 = scmp.ne.s32.totalorder %s33, %s36
    %p42 = scmp.eq.s32.totalorder %s9, 0
    %p43 = por %p41, %p42
    %p44 = scmp.ne.s32.totalorder %s33, %s36
    %p45 = scmp.eq.s32.totalorder %s14, 1
    %p46 = por %p44, %p45
    %p47 = scmp.ne.s32.totalorder %s36, %s37
    %p48 = scmp.eq.s32.totalorder %s14, 0
    %p49 = por %p47, %p48
    %p50 = scmp.ne.s32.totalorder %s36, %s37
    %p51 = scmp.eq.s32.totalorder %s15, 1
    %p52 = por %p50, %p51
    %p54 = scmp.ne.s32.totalorder %s37, %s53
    %p55 = scmp.eq.s32.totalorder %s15, 0
    %p56 = por %p54, %p55
    %s58 = sadd.s32 %s57, 1
    %p61 = scmp.eq.s32.totalorder %s9, 1
    %p62 = scmp.ne.s32.totalorder %s57, %s59
    %p63 = scmp.eq.s32.totalorder %s9, 0
    %p64 = por %p62, %p63
    %p65 = scmp.ne.s32.totalorder %s57, %s59
    %p66 = scmp.eq.s32.totalorder %s14, 1
    %p67 = por %p65, %p66
    %p68 = scmp.ne.s32.totalorder %s59, %s60
    %p69 = scmp.eq.s32.totalorder %s14, 0
    %p70 = por %p68, %p69
    %p71 = scmp.ne.s32.totalorder %s59, %s60
    %p72 = scmp.eq.s32.totalorder %s15, 1
    %p73 = por %p71, %p72
    %p75 = scmp.ne.s32.totalorder %s60, %s74
    %p76 = scmp.eq.s32.totalorder %s15, 0
    %p77 = por %p75, %p76
    %s79 = sadd.s32 %s78, 1
    %p82 = scmp.eq.s32.totalorder %s9, 1
    %p83 = scmp.ne.s32.totalorder %s78, %s80
    %p84 = scmp.eq.s32.totalorder %s9, 0
    %p85 = por %p83, %p84
    %p86 = scmp.ne.s32.totalorder %s78, %s80
    %p87 = scmp.eq.s32.totalorder %s14, 1
    %p88 = por %p86, %p87
    %p89 = scmp.ne.s32.totalorder %s80, %s81
    %p90 = scmp.eq.s32.totalorder %s14, 0
    %p91 = por %p89, %p90
    %p92 = scmp.ne.s32.totalorder %s80, %s81
    %p93 = scmp.eq.s32.totalorder %s15, 1
    %p94 = por %p92, %p93
    %p96 = scmp.ne.s32.totalorder %s81, %s95
    %p97 = scmp.eq.s32.totalorder %s15, 0
    %p98 = por %p96, %p97
    %s99 = ssub.s32 %s16, %s28
    %s100 = ssub.s32 %s17, %s24
    %s101 = sor.u32 %s99, %s100
    %p102 = scmp.eq.s32.totalorder %s101, 0
    %s104 = sadd.s32 %s103, 1
    %s105 = scalar_select %p102, %s103, %s104
    %p108 = pneg %p102
    %p109 = scmp.eq.s32.totalorder %s9, 1
    %p110 = por %p108, %p109
    %p111 = scmp.ne.s32.totalorder %s103, %s106
    %p112 = scmp.eq.s32.totalorder %s9, 0
    %p113 = por %p111, %p112
    %p114 = scmp.ne.s32.totalorder %s103, %s106
    %p115 = scmp.eq.s32.totalorder %s14, 1
    %p116 = por %p114, %p115
    %p117 = scmp.ne.s32.totalorder %s106, %s107
    %p118 = scmp.eq.s32.totalorder %s14, 0
    %p119 = por %p117, %p118
    %p120 = scmp.ne.s32.totalorder %s106, %s107
    %p121 = scmp.eq.s32.totalorder %s15, 1
    %p122 = por %p120, %p121
    %p124 = scmp.ne.s32.totalorder %s107, %s123
    %p125 = scmp.eq.s32.totalorder %s15, 0
    %p126 = por %p124, %p125
    %p127 = scmp.le.s32.totalorder 1, %s9
    %p128 = scmp.lt.s32.totalorder %s9, 3
    %p129 = pnand %p127, %p128
    %p130 = pneg %p129
    // Predicated region
    $region9: #{downsample_forward.1} parent=5 // pred_check
      _
    $region10: #{downsample_forward.1} parent=5 // pred_check_branch
      %132 = sbr.rel (%p129) target = $region12
    $region11: #{downsample_forward.1} parent=5 // pred_region
      %s133 = ssub.s32 %s9, 1
      // Predicated region
      $region13: #{downsample_forward.1} parent=11 // pred_check
        %p134 = pneg %p70
      $region14: #{downsample_forward.1} parent=11 // pred_check_branch
        %136 = sbr.rel (%p134) target = $region16
      $region15: #{downsample_forward.1} parent=11 // pred_region
        _
      $region16: #{downsample_forward.1} parent=11 // pred_fallthru
        _
      // Predicated region
      $region17: #{downsample_forward.1} parent=11 // pred_check
        %p137 = pneg %p91
      $region18: #{downsample_forward.1} parent=11 // pred_check_branch
        %139 = sbr.rel (%p137) target = $region20
      $region19: #{downsample_forward.1} parent=11 // pred_region
        _
      $region20: #{downsample_forward.1} parent=11 // pred_fallthru
        _
    $region12: #{downsample_forward.1} parent=5 // pred_fallthru
      _
    %p140 = scmp.lt.s32.totalorder %s9, 2
    // Predicated region
    $region21: #{downsample_forward.1} parent=5 // pred_check
      %p141 = pneg %p140
    $region22: #{downsample_forward.1} parent=5 // pred_check_branch
      %143 = sbr.rel (%p141) target = $region24
    $region23: #{downsample_forward.1} parent=5 // pred_region
      // Predicated region
      $region25: #{downsample_forward.1} parent=23 // pred_check
        %p144 = pneg %p43
      $region26: #{downsample_forward.1} parent=23 // pred_check_branch
        %146 = sbr.rel (%p144) target = $region28
      $region27: #{downsample_forward.1} parent=23 // pred_region
        %s147 = smul.u32 8, %s17
        %p148 = scmp.lt.s32.totalorder %s16, 1
        %s149 = scalar_select %p148, %s16, 1
        %p150 = scmp.lt.s32.totalorder %s147, 7
        %s151 = scalar_select %p150, %s147, 7
        %s152 = smul.addr %s151, 6
        %s153 = smul.addr %s149, 48
        %s154 = sadd.s32 %s152, %s153
        %s155 = smul.addr %s154, 4
        %s156 = scalar_lea.vmem %s0, %s155
        %s157 = smul.u32 8, %s17
      $region28: #{downsample_forward.1} parent=23 // pred_fallthru
        _
    $region24: #{downsample_forward.1} parent=5 // pred_fallthru
      _
    %p158 = scmp.le.s32.totalorder 1, %s9
    %p159 = scmp.lt.s32.totalorder %s9, 3
    %p160 = pnand %p158, %p159
    %p161 = pneg %p160
    // Predicated region
    $region29: #{downsample_forward.1} parent=5 // pred_check
      _
    $region30: #{downsample_forward.1} parent=5 // pred_check_branch
      %163 = sbr.rel (%p160) target = $region32
    $region31: #{downsample_forward.1} parent=5 // pred_region
      %s164 = ssub.s32 %s9, 1
      %s165 = smul.u32 8, %s19
      %p166 = scmp.lt.s32.totalorder %s18, 1
      %s167 = scalar_select %p166, %s18, 1
      %p168 = scmp.lt.s32.totalorder %s165, 7
      %s169 = scalar_select %p168, %s165, 7
      %s170 = smul.addr %s169, 6
      %s171 = smul.addr %s167, 48
      %s172 = sadd.s32 %s170, %s171
      %s173 = smul.addr %s172, 4
      %s174 = scalar_lea.vmem %s0, %s173
      %p175 = pneg %p49
      %p176 = pneg %p46
      %p177 = pneg %p70
      %p178 = pneg %p67
      %p179 = pneg %p91
      %p180 = pneg %p88
      %p181 = pneg %p119
      %p182 = pneg %p116
      %s183 = smul.u32 8, %s19
      %p184 = scmp.lt.s32.totalorder %s18, 1
      %s185 = scalar_select %p184, %s18, 1
      %p186 = scmp.lt.s32.totalorder %s183, 7
      %s187 = scalar_select %p186, %s183, 7
      %s188 = smul.addr %s187, 2
      %s189 = smul.addr %s185, 16
      %s190 = sadd.s32 %s188, %s189
      %s191 = smul.addr %s190, 8
      %s192 = scalar_lea.vmem %s3, %s191
      %s193 = smul.u32 8, %s19
      %p194 = scmp.lt.s32.totalorder %s18, 1
      %s195 = scalar_select %p194, %s18, 1
      %p196 = scmp.lt.s32.totalorder %s193, 7
      %s197 = scalar_select %p196, %s193, 7
      %s198 = smul.addr %s197, 6
      %s199 = smul.addr %s195, 48
      %s200 = sadd.s32 %s198, %s199
      %s201 = smul.addr %s200, 4
      %s202 = scalar_lea.vmem %s0, %s201
      %s203 = smul.u32 8, %s19
      %s204 = smul.u32 8, %s19
      %p205 = scmp.lt.s32.totalorder %s18, 1
      %s206 = scalar_select %p205, %s18, 1
      %p207 = scmp.lt.s32.totalorder %s204, 7
      %s208 = scalar_select %p207, %s204, 7
      %s209 = smul.addr %s208, 2
      %s210 = smul.addr %s206, 16
      %s211 = sadd.s32 %s209, %s210
      %s212 = smul.addr %s211, 8
      %s213 = scalar_lea.vmem %s3, %s212
      %s214 = smul.u32 8, %s19
      %v216 = vld [vmem:[%s202] sm:$0xff]
      %v217 = vld [vmem:[%s202 + $0x8] sm:$0xf]
      %v218 = vld [vmem:[%s202 + $0xc] sm:$0xff]
      %v219 = vld [vmem:[%s202 + $0x14] sm:$0xf]
      %v220 = vld [vmem:[%s202 + $0x18] sm:$0xff]
      %v221 = vld [vmem:[%s202 + $0x20] sm:$0xf]
      %v222 = vld [vmem:[%s202 + $0x24] sm:$0xff]
      %v223 = vld [vmem:[%s202 + $0x2c] sm:$0xf]
      %v224 = vld [vmem:[%s202 + $0x30] sm:$0xff]
      %v225 = vld [vmem:[%s202 + $0x38] sm:$0xf]
      %v226 = vld [vmem:[%s202 + $0x3c] sm:$0xff]
      %v227 = vld [vmem:[%s202 + $0x44] sm:$0xf]
      %v228 = vld [vmem:[%s202 + $0x48] sm:$0xff]
      %v229 = vld [vmem:[%s202 + $0x50] sm:$0xf]
      %v230 = vld [vmem:[%s202 + $0x54] sm:$0xff]
      %v231 = vld [vmem:[%s202 + $0x5c] sm:$0xf]
      %v232 = vld [vmem:[%s202 + $0x60] sm:$0xff]
      %v233 = vld [vmem:[%s202 + $0x68] sm:$0xf]
      %v234 = vld [vmem:[%s202 + $0x6c] sm:$0xff]
      %v235 = vld [vmem:[%s202 + $0x74] sm:$0xf]
      %v236 = vld [vmem:[%s202 + $0x78] sm:$0xff]
      %v237 = vld [vmem:[%s202 + $0x80] sm:$0xf]
      %v238 = vld [vmem:[%s202 + $0x84] sm:$0xff]
      %v239 = vld [vmem:[%s202 + $0x8c] sm:$0xf]
      %v240 = vld [vmem:[%s202 + $0x90] sm:$0xff]
      %v241 = vld [vmem:[%s202 + $0x98] sm:$0xf]
      %v242 = vld [vmem:[%s202 + $0x9c] sm:$0xff]
      %v243 = vld [vmem:[%s202 + $0xa4] sm:$0xf]
      %v244 = vld [vmem:[%s202 + $0xa8] sm:$0xff]
      %v245 = vld [vmem:[%s202 + $0xb0] sm:$0xf]
      %v246 = vld [vmem:[%s202 + $0xb4] sm:$0xff]
      %v247 = vld [vmem:[%s202 + $0xbc] sm:$0xf]
      %v248 = vld [vmem:[%s1] sm:$0xf]
      %v249 = vld [vmem:[%s1 + $0x4] sm:$0xf]
      %v250 = vld [vmem:[%s1 + $0x8] sm:$0xf]
      %v251 = vld [vmem:[%s1 + $0xc] sm:$0xf]
      %v252 = vld [vmem:[%s1 + $0x10] sm:$0xf]
      %v253 = vld [vmem:[%s1 + $0x14] sm:$0xf]
      %v254 = vld [vmem:[%s1 + $0x18] sm:$0xf]
      %v255 = vld [vmem:[%s1 + $0x1c] sm:$0xf]
      %v256 = vld [vmem:[%s1 + $0x20] sm:$0xf]
      %v257 = vld [vmem:[%s1 + $0x24] sm:$0xf]
      %v258 = vld [vmem:[%s1 + $0x28] sm:$0xf]
      %v259 = vld [vmem:[%s1 + $0x2c] sm:$0xf]
      %v260 = vld [vmem:[%s1 + $0x30] sm:$0xf]
      %v261 = vld [vmem:[%s1 + $0x34] sm:$0xf]
      %v262 = vld [vmem:[%s1 + $0x38] sm:$0xf]
      %v263 = vld [vmem:[%s1 + $0x3c] sm:$0xf]
      %v264 = vld [vmem:[%s1 + $0x40] sm:$0xf]
      %v265 = vld [vmem:[%s1 + $0x44] sm:$0xf]
      %v266 = vld [vmem:[%s1 + $0x48] sm:$0xf]
      %v267 = vld [vmem:[%s1 + $0x4c] sm:$0xf]
      %v268 = vld [vmem:[%s1 + $0x50] sm:$0xf]
      %v269 = vld [vmem:[%s1 + $0x54] sm:$0xf]
      %v270 = vld [vmem:[%s1 + $0x58] sm:$0xf]
      %v271 = vld [vmem:[%s1 + $0x5c] sm:$0xf]
      %v272 = vld [vmem:[%s1 + $0x60] sm:$0xf]
      %v273 = vld [vmem:[%s1 + $0x64] sm:$0xf]
      %v274 = vld [vmem:[%s1 + $0x68] sm:$0xf]
      %v275 = vld [vmem:[%s1 + $0x6c] sm:$0xf]
      %v276 = vld [vmem:[%s1 + $0x70] sm:$0xf]
      %v277 = vld [vmem:[%s1 + $0x74] sm:$0xf]
      %v278 = vld [vmem:[%s1 + $0x78] sm:$0xf]
      %v279 = vld [vmem:[%s1 + $0x7c] sm:$0xf]
      %v280 = vld [vmem:[%s1 + $0x80] sm:$0xf]
      %v281 = vld [vmem:[%s1 + $0x84] sm:$0xf]
      %v282 = vld [vmem:[%s1 + $0x88] sm:$0xf]
      %v283 = vld [vmem:[%s1 + $0x8c] sm:$0xf]
      %v284 = vld [vmem:[%s1 + $0x90] sm:$0xf]
      %v285 = vld [vmem:[%s1 + $0x94] sm:$0xf]
      %v286 = vld [vmem:[%s1 + $0x98] sm:$0xf]
      %v287 = vld [vmem:[%s1 + $0x9c] sm:$0xf]
      %v288 = vld [vmem:[%s1 + $0xa0] sm:$0xf]
      %v289 = vld [vmem:[%s1 + $0xa4] sm:$0xf]
      %v290 = vld [vmem:[%s1 + $0xa8] sm:$0xf]
      %v291 = vld [vmem:[%s1 + $0xac] sm:$0xf]
      %v292 = vld [vmem:[%s1 + $0xb0] sm:$0xf]
      %v293 = vld [vmem:[%s1 + $0xb4] sm:$0xf]
      %v294 = vld [vmem:[%s1 + $0xb8] sm:$0xf]
      %v295 = vld [vmem:[%s1 + $0xbc] sm:$0xf]
      %s296 = scalar_lea.vmem %s1, 192
      %v297 = vld [vmem:[%s296] sm:$0xf]
      %v298 = vld [vmem:[%s296 + $0x4] sm:$0xf]
      %v299 = vld [vmem:[%s296 + $0x8] sm:$0xf]
      %v300 = vld [vmem:[%s296 + $0xc] sm:$0xf]
      %v301 = vld [vmem:[%s296 + $0x10] sm:$0xf]
      %v302 = vld [vmem:[%s296 + $0x14] sm:$0xf]
      %v303 = vld [vmem:[%s296 + $0x18] sm:$0xf]
      %v304 = vld [vmem:[%s296 + $0x1c] sm:$0xf]
      %v305 = vld [vmem:[%s296 + $0x20] sm:$0xf]
      %v306 = vld [vmem:[%s296 + $0x24] sm:$0xf]
      %v307 = vld [vmem:[%s296 + $0x28] sm:$0xf]
      %v308 = vld [vmem:[%s296 + $0x2c] sm:$0xf]
      %v309 = vld [vmem:[%s296 + $0x30] sm:$0xf]
      %v310 = vld [vmem:[%s296 + $0x34] sm:$0xf]
      %v311 = vld [vmem:[%s296 + $0x38] sm:$0xf]
      %v312 = vld [vmem:[%s296 + $0x3c] sm:$0xf]
      %v313 = vld [vmem:[%s296 + $0x40] sm:$0xf]
      %v314 = vld [vmem:[%s296 + $0x44] sm:$0xf]
      %v315 = vld [vmem:[%s296 + $0x48] sm:$0xf]
      %v316 = vld [vmem:[%s296 + $0x4c] sm:$0xf]
      %v317 = vld [vmem:[%s296 + $0x50] sm:$0xf]
      %v318 = vld [vmem:[%s296 + $0x54] sm:$0xf]
      %v319 = vld [vmem:[%s296 + $0x58] sm:$0xf]
      %v320 = vld [vmem:[%s296 + $0x5c] sm:$0xf]
      %v321 = vld [vmem:[%s296 + $0x60] sm:$0xf]
      %v322 = vld [vmem:[%s296 + $0x64] sm:$0xf]
      %v323 = vld [vmem:[%s296 + $0x68] sm:$0xf]
      %v324 = vld [vmem:[%s296 + $0x6c] sm:$0xf]
      %v325 = vld [vmem:[%s296 + $0x70] sm:$0xf]
      %v326 = vld [vmem:[%s296 + $0x74] sm:$0xf]
      %v327 = vld [vmem:[%s296 + $0x78] sm:$0xf]
      %v328 = vld [vmem:[%s296 + $0x7c] sm:$0xf]
      %v329 = vld [vmem:[%s296 + $0x80] sm:$0xf]
      %v330 = vld [vmem:[%s296 + $0x84] sm:$0xf]
      %v331 = vld [vmem:[%s296 + $0x88] sm:$0xf]
      %v332 = vld [vmem:[%s296 + $0x8c] sm:$0xf]
      %v333 = vld [vmem:[%s296 + $0x90] sm:$0xf]
      %v334 = vld [vmem:[%s296 + $0x94] sm:$0xf]
      %v335 = vld [vmem:[%s296 + $0x98] sm:$0xf]
      %v336 = vld [vmem:[%s296 + $0x9c] sm:$0xf]
      %v337 = vld [vmem:[%s296 + $0xa0] sm:$0xf]
      %v338 = vld [vmem:[%s296 + $0xa4] sm:$0xf]
      %v339 = vld [vmem:[%s296 + $0xa8] sm:$0xf]
      %v340 = vld [vmem:[%s296 + $0xac] sm:$0xf]
      %v341 = vld [vmem:[%s296 + $0xb0] sm:$0xf]
      %v342 = vld [vmem:[%s296 + $0xb4] sm:$0xf]
      %v343 = vld [vmem:[%s296 + $0xb8] sm:$0xf]
      %v344 = vld [vmem:[%s296 + $0xbc] sm:$0xf]
      %v377 = vunpack.c.l.b16 %v216
      %v378 = vunpack.c.h.b16 %v216
      %v379 = vunpack.c.l.b16 %v217
      %v380 = vunpack.c.l.b16 %v218
      %v381 = vunpack.c.h.b16 %v218
      %v382 = vunpack.c.l.b16 %v219
      %v383 = vunpack.c.l.b16 %v220
      %v384 = vunpack.c.h.b16 %v220
      %v385 = vunpack.c.l.b16 %v221
      %v386 = vunpack.c.l.b16 %v222
      %v387 = vunpack.c.h.b16 %v222
      %v388 = vunpack.c.l.b16 %v223
      %v389 = vunpack.c.l.b16 %v224
      %v390 = vunpack.c.h.b16 %v224
      %v391 = vunpack.c.l.b16 %v225
      %v392 = vunpack.c.l.b16 %v226
      %v393 = vunpack.c.h.b16 %v226
      %v394 = vunpack.c.l.b16 %v227
      %v395 = vunpack.c.l.b16 %v228
      %v396 = vunpack.c.h.b16 %v228
      %v397 = vunpack.c.l.b16 %v229
      %v398 = vunpack.c.l.b16 %v230
      %v399 = vunpack.c.h.b16 %v230
      %v400 = vunpack.c.l.b16 %v231
      %v401 = vunpack.c.l.b16 %v232
      %v402 = vunpack.c.h.b16 %v232
      %v403 = vunpack.c.l.b16 %v233
      %v404 = vunpack.c.l.b16 %v234
      %v405 = vunpack.c.h.b16 %v234
      %v406 = vunpack.c.l.b16 %v235
      %v407 = vunpack.c.l.b16 %v236
      %v408 = vunpack.c.h.b16 %v236
      %v409 = vunpack.c.l.b16 %v237
      %v410 = vunpack.c.l.b16 %v238
      %v411 = vunpack.c.h.b16 %v238
      %v412 = vunpack.c.l.b16 %v239
      %v413 = vunpack.c.l.b16 %v240
      %v414 = vunpack.c.h.b16 %v240
      %v415 = vunpack.c.l.b16 %v241
      %v416 = vunpack.c.l.b16 %v242
      %v417 = vunpack.c.h.b16 %v242
      %v418 = vunpack.c.l.b16 %v243
      %v419 = vunpack.c.l.b16 %v244
      %v420 = vunpack.c.h.b16 %v244
      %v421 = vunpack.c.l.b16 %v245
      %v422 = vunpack.c.l.b16 %v246
      %v423 = vunpack.c.h.b16 %v246
      %v424 = vunpack.c.l.b16 %v247
      %v425 = vpack.c.b16 %v380, %v377
      %v426 = vpack.c.b16 %v381, %v378
      %v427 = vpack.c.b16 %v382, %v379
      %v428 = vpack.c.b16 %v386, %v383
      %v429 = vpack.c.b16 %v387, %v384
      %v430 = vpack.c.b16 %v388, %v385
      %v431 = vpack.c.b16 %v392, %v389
      %v432 = vpack.c.b16 %v393, %v390
      %v433 = vpack.c.b16 %v394, %v391
      %v434 = vpack.c.b16 %v398, %v395
      %v435 = vpack.c.b16 %v399, %v396
      %v436 = vpack.c.b16 %v400, %v397
      %v437 = vpack.c.b16 %v404, %v401
      %v438 = vpack.c.b16 %v405, %v402
      %v439 = vpack.c.b16 %v406, %v403
      %v440 = vpack.c.b16 %v410, %v407
      %v441 = vpack.c.b16 %v411, %v408
      %v442 = vpack.c.b16 %v412, %v409
      %v443 = vpack.c.b16 %v416, %v413
      %v444 = vpack.c.b16 %v417, %v414
      %v445 = vpack.c.b16 %v418, %v415
      %v446 = vpack.c.b16 %v422, %v419
      %v447 = vpack.c.b16 %v423, %v420
      %v448 = vpack.c.b16 %v424, %v421
      %v521 = vunpack.c.l.b16 %v297
      %v522 = vunpack.c.l.b16 %v298
      %v523 = vunpack.c.l.b16 %v299
      %v524 = vunpack.c.l.b16 %v300
      %v525 = vunpack.c.l.b16 %v301
      %v526 = vunpack.c.l.b16 %v302
      %v527 = vunpack.c.l.b16 %v303
      %v528 = vunpack.c.l.b16 %v304
      %v529 = vunpack.c.l.b16 %v305
      %v530 = vunpack.c.l.b16 %v306
      %v531 = vunpack.c.l.b16 %v307
      %v532 = vunpack.c.l.b16 %v308
      %v533 = vunpack.c.l.b16 %v309
      %v534 = vunpack.c.l.b16 %v310
      %v535 = vunpack.c.l.b16 %v311
      %v536 = vunpack.c.l.b16 %v312
      %v537 = vunpack.c.l.b16 %v313
      %v538 = vunpack.c.l.b16 %v314
      %v539 = vunpack.c.l.b16 %v315
      %v540 = vunpack.c.l.b16 %v316
      %v541 = vunpack.c.l.b16 %v317
      %v542 = vunpack.c.l.b16 %v318
      %v543 = vunpack.c.l.b16 %v319
      %v544 = vunpack.c.l.b16 %v320
      %v545 = vunpack.c.l.b16 %v321
      %v546 = vunpack.c.l.b16 %v322
      %v547 = vunpack.c.l.b16 %v323
      %v548 = vunpack.c.l.b16 %v324
      %v549 = vunpack.c.l.b16 %v325
      %v550 = vunpack.c.l.b16 %v326
      %v551 = vunpack.c.l.b16 %v327
      %v552 = vunpack.c.l.b16 %v328
      %v553 = vunpack.c.l.b16 %v329
      %v554 = vunpack.c.l.b16 %v330
      %v555 = vunpack.c.l.b16 %v331
      %v556 = vunpack.c.l.b16 %v332
      %v557 = vunpack.c.l.b16 %v333
      %v558 = vunpack.c.l.b16 %v334
      %v559 = vunpack.c.l.b16 %v335
      %v560 = vunpack.c.l.b16 %v336
      %v561 = vunpack.c.l.b16 %v337
      %v562 = vunpack.c.l.b16 %v338
      %v563 = vunpack.c.l.b16 %v339
      %v564 = vunpack.c.l.b16 %v340
      %v565 = vunpack.c.l.b16 %v341
      %v566 = vunpack.c.l.b16 %v342
      %v567 = vunpack.c.l.b16 %v343
      %v568 = vunpack.c.l.b16 %v344
      %v569 = vpack.c.b16 %v522, %v521
      %v570 = vpack.c.b16 %v524, %v523
      %v571 = vpack.c.b16 %v526, %v525
      %v572 = vpack.c.b16 %v528, %v527
      %v573 = vpack.c.b16 %v530, %v529
      %v574 = vpack.c.b16 %v532, %v531
      %v575 = vpack.c.b16 %v534, %v533
      %v576 = vpack.c.b16 %v536, %v535
      %v577 = vpack.c.b16 %v538, %v537
      %v578 = vpack.c.b16 %v540, %v539
      %v579 = vpack.c.b16 %v542, %v541
      %v580 = vpack.c.b16 %v544, %v543
      %v581 = vpack.c.b16 %v546, %v545
      %v582 = vpack.c.b16 %v548, %v547
      %v583 = vpack.c.b16 %v550, %v549
      %v584 = vpack.c.b16 %v552, %v551
      %v585 = vpack.c.b16 %v554, %v553
      %v586 = vpack.c.b16 %v556, %v555
      %v587 = vpack.c.b16 %v558, %v557
      %v588 = vpack.c.b16 %v560, %v559
      %v589 = vpack.c.b16 %v562, %v561
      %v590 = vpack.c.b16 %v564, %v563
      %v591 = vpack.c.b16 %v566, %v565
      %v592 = vpack.c.b16 %v568, %v567
      %617 = vmatprep.subr.bf16.mxu0 0
      %618 = vmatpush1.bf16.msra.mxu0 %v569
      %619 = vmatprep.subr.bf16.mxu0 0
      %620 = vmatpush1.bf16.msra.mxu0 %v570
      %621 = vmatprep.subr.bf16.mxu0 0
      %622 = vmatpush1.bf16.msra.mxu0 %v571
      %623 = vmatprep.subr.bf16.mxu0 0
      %624 = vmatpush1.bf16.msra.mxu0 %v572
      %625 = vmatprep.subr.bf16.mxu0 0
      %626 = vmatpush1.bf16.msra.mxu0 %v573
      %627 = vmatprep.subr.bf16.mxu0 0
      %628 = vmatpush1.bf16.msra.mxu0 %v574
      %629 = vmatprep.subr.bf16.mxu0 0
      %630 = vmatpush1.bf16.msra.mxu0 %v575
      %631 = vmatprep.subr.bf16.mxu0 0
      %632 = vmatpush1.bf16.msra.mxu0 %v576
      %633 = vmatprep.subr.bf16.mxu0 0
      %634 = vmatpush1.bf16.msra.mxu0 %v577
      %635 = vmatprep.subr.bf16.mxu0 0
      %636 = vmatpush1.bf16.msra.mxu0 %v578
      %637 = vmatprep.subr.bf16.mxu0 0
      %638 = vmatpush1.bf16.msra.mxu0 %v579
      %639 = vmatprep.subr.bf16.mxu0 0
      %640 = vmatpush1.bf16.msra.mxu0 %v580
      %641 = vmatprep.subr.bf16.mxu0 0
      %642 = vmatpush1.bf16.msra.mxu0 %v581
      %643 = vmatprep.subr.bf16.mxu0 0
      %644 = vmatpush1.bf16.msra.mxu0 %v582
      %645 = vmatprep.subr.bf16.mxu0 0
      %646 = vmatpush1.bf16.msra.mxu0 %v583
      %647 = vmatprep.subr.bf16.mxu0 0
      %648 = vmatpush1.bf16.msra.mxu0 %v584
      %649 = vmatprep.mubr.bf16.mxu0 %v426
      %650 = vmatmul.mubr.bf16.gmra.mrb[0].mxu0 %v425
      %v651 = vpop.f32.mrb[0].mxu0
      %v652 = vadd.f32 0.0, %v651
      %v653 = vpop.f32.mrb[0].mxu0
      %v654 = vpop.f32.mrb[0].mxu0
      %v655 = vadd.f32 0.0, %v654
      %v656 = vpop.f32.mrb[0].mxu0
      %657 = vmatprep.mubr.bf16.mxu0 %v429
      %658 = vmatmul.mubr.bf16.gmra.mrb[0].mxu0 %v428
      %v659 = vpop.f32.mrb[0].mxu0
      %v660 = vadd.f32 0.0, %v659
      %v661 = vpop.f32.mrb[0].mxu0
      %v662 = vpop.f32.mrb[0].mxu0
      %v663 = vadd.f32 0.0, %v662
      %v664 = vpop.f32.mrb[0].mxu0
      %665 = vmatprep.mubr.bf16.mxu0 %v432
      %666 = vmatmul.mubr.bf16.gmra.mrb[0].mxu0 %v431
      %v667 = vpop.f32.mrb[0].mxu0
      %v668 = vadd.f32 0.0, %v667
      %v669 = vpop.f32.mrb[0].mxu0
      %v670 = vpop.f32.mrb[0].mxu0
      %v671 = vadd.f32 0.0, %v670
      %v672 = vpop.f32.mrb[0].mxu0
      %673 = vmatprep.mubr.bf16.mxu0 %v435
      %674 = vmatmul.mubr.bf16.gmra.mrb[0].mxu0 %v434
      %v675 = vpop.f32.mrb[0].mxu0
      %v676 = vadd.f32 0.0, %v675
      %v677 = vpop.f32.mrb[0].mxu0
      %v678 = vpop.f32.mrb[0].mxu0
      %v679 = vadd.f32 0.0, %v678
      %v680 = vpop.f32.mrb[0].mxu0
      %681 = vmatprep.mubr.bf16.mxu0 %v438
      %682 = vmatmul.mubr.bf16.gmra.mrb[0].mxu0 %v437
      %v683 = vpop.f32.mrb[0].mxu0
      %v684 = vadd.f32 0.0, %v683
      %v685 = vpop.f32.mrb[0].mxu0
      %v686 = vpop.f32.mrb[0].mxu0
      %v687 = vadd.f32 0.0, %v686
      %v688 = vpop.f32.mrb[0].mxu0
      %689 = vmatprep.mubr.bf16.mxu0 %v441
      %690 = vmatmul.mubr.bf16.gmra.mrb[0].mxu0 %v440
      %v691 = vpop.f32.mrb[0].mxu0
      %v692 = vadd.f32 0.0, %v691
      %v693 = vpop.f32.mrb[0].mxu0
      %v694 = vpop.f32.mrb[0].mxu0
      %v695 = vadd.f32 0.0, %v694
      %v696 = vpop.f32.mrb[0].mxu0
      %697 = vmatprep.mubr.bf16.mxu0 %v444
      %698 = vmatmul.mubr.bf16.gmra.mrb[0].mxu0 %v443
      %v699 = vpop.f32.mrb[0].mxu0
      %v700 = vadd.f32 0.0, %v699
      %v701 = vpop.f32.mrb[0].mxu0
      %v702 = vpop.f32.mrb[0].mxu0
      %v703 = vadd.f32 0.0, %v702
      %v704 = vpop.f32.mrb[0].mxu0
      %705 = vmatprep.mubr.bf16.mxu0 %v447
      %706 = vmatmul.mubr.bf16.gmra.mrb[0].mxu0 %v446
      %v707 = vpop.f32.mrb[0].mxu0
      %v708 = vadd.f32 0.0, %v707
      %v709 = vpop.f32.mrb[0].mxu0
      %v710 = vpop.f32.mrb[0].mxu0
      %v711 = vadd.f32 0.0, %v710
      %v712 = vpop.f32.mrb[0].mxu0
      %713 = vdwg.mxu0
      %714 = vmatprep.subr.bf16.mxu0 0
      %715 = vmatpush1.bf16.msra.mxu0 %v585
      %716 = vmatprep.subr.bf16.mxu0 0
      %717 = vmatpush1.bf16.msra.mxu0 %v586
      %718 = vmatprep.subr.bf16.mxu0 0
      %719 = vmatpush1.bf16.msra.mxu0 %v587
      %720 = vmatprep.subr.bf16.mxu0 0
      %721 = vmatpush1.bf16.msra.mxu0 %v588
      %722 = vmatprep.subr.bf16.mxu0 0
      %723 = vmatpush1.bf16.msra.mxu0 %v589
      %724 = vmatprep.subr.bf16.mxu0 0
      %725 = vmatpush1.bf16.msra.mxu0 %v590
      %726 = vmatprep.subr.bf16.mxu0 0
      %727 = vmatpush1.bf16.msra.mxu0 %v591
      %728 = vmatprep.subr.bf16.mxu0 0
      %729 = vmatpush1.bf16.msra.mxu0 %v592
      %730 = vmatprep.subr.bf16.mxu0 0
      %731 = vmatpush1.bf16.msra.mxu0 0
      %732 = vmatprep.subr.bf16.mxu0 0
      %733 = vmatpush1.bf16.msra.mxu0 0
      %734 = vmatprep.subr.bf16.mxu0 0
      %735 = vmatpush1.bf16.msra.mxu0 0
      %736 = vmatprep.subr.bf16.mxu0 0
      %737 = vmatpush1.bf16.msra.mxu0 0
      %738 = vmatprep.subr.bf16.mxu0 0
      %739 = vmatpush1.bf16.msra.mxu0 0
      %740 = vmatprep.subr.bf16.mxu0 0
      %741 = vmatpush1.bf16.msra.mxu0 0
      %742 = vmatprep.subr.bf16.mxu0 0
      %743 = vmatpush1.bf16.msra.mxu0 0
      %744 = vmatprep.subr.bf16.mxu0 0
      %745 = vmatpush1.bf16.msra.mxu0 0
      %746 = vmatprep.mubr.bf16.mxu0 0
      %747 = vmatmul.mubr.bf16.gmra.mrb[0].mxu0 %v427
      %v748 = vpop.f32.mrb[0].mxu0
      %v749 = vadd.f32 %v652, %v748
      %v750 = vpop.f32.mrb[0].mxu0
      %v751 = vpop.f32.mrb[0].mxu0
      %v752 = vadd.f32 %v655, %v751
      %v753 = vpop.f32.mrb[0].mxu0
      %754 = vmatprep.mubr.bf16.mxu0 0
      %755 = vmatmul.mubr.bf16.gmra.mrb[0].mxu0 %v430
      %v756 = vpop.f32.mrb[0].mxu0
      %v757 = vadd.f32 %v660, %v756
      %v758 = vpop.f32.mrb[0].mxu0
      %v759 = vpop.f32.mrb[0].mxu0
      %v760 = vadd.f32 %v663, %v759
      %v761 = vpop.f32.mrb[0].mxu0
      %762 = vmatprep.mubr.bf16.mxu0 0
      %763 = vmatmul.mubr.bf16.gmra.mrb[0].mxu0 %v433
      %v764 = vpop.f32.mrb[0].mxu0
      %v765 = vadd.f32 %v668, %v764
      %v766 = vpop.f32.mrb[0].mxu0
      %v767 = vpop.f32.mrb[0].mxu0
      %v768 = vadd.f32 %v671, %v767
      %v769 = vpop.f32.mrb[0].mxu0
      %770 = vmatprep.mubr.bf16.mxu0 0
      %771 = vmatmul.mubr.bf16.gmra.mrb[0].mxu0 %v436
      %v772 = vpop.f32.mrb[0].mxu0
      %v773 = vadd.f32 %v676, %v772
      %v774 = vpop.f32.mrb[0].mxu0
      %v775 = vpop.f32.mrb[0].mxu0
      %v776 = vadd.f32 %v679, %v775
      %v777 = vpop.f32.mrb[0].mxu0
      %778 = vmatprep.mubr.bf16.mxu0 0
      %779 = vmatmul.mubr.bf16.gmra.mrb[0].mxu0 %v439
      %v780 = vpop.f32.mrb[0].mxu0
      %v781 = vadd.f32 %v684, %v780
      %v782 = vpop.f32.mrb[0].mxu0
      %v783 = vpop.f32.mrb[0].mxu0
      %v784 = vadd.f32 %v687, %v783
      %v785 = vpop.f32.mrb[0].mxu0
      %786 = vmatprep.mubr.bf16.mxu0 0
      %787 = vmatmul.mubr.bf16.gmra.mrb[0].mxu0 %v442
      %v788 = vpop.f32.mrb[0].mxu0
      %v789 = vadd.f32 %v692, %v788
      %v790 = vpop.f32.mrb[0].mxu0
      %v791 = vpop.f32.mrb[0].mxu0
      %v792 = vadd.f32 %v695, %v791
      %v793 = vpop.f32.mrb[0].mxu0
      %794 = vmatprep.mubr.bf16.mxu0 0
      %795 = vmatmul.mubr.bf16.gmra.mrb[0].mxu0 %v445
      %v796 = vpop.f32.mrb[0].mxu0
      %v797 = vadd.f32 %v700, %v796
      %v798 = vpop.f32.mrb[0].mxu0
      %v799 = vpop.f32.mrb[0].mxu0
      %v800 = vadd.f32 %v703, %v799
      %v801 = vpop.f32.mrb[0].mxu0
      %802 = vmatprep.mubr.bf16.mxu0 0
      %803 = vmatmul.mubr.bf16.gmra.mrb[0].mxu0 %v448
      %v804 = vpop.f32.mrb[0].mxu0
      %v805 = vadd.f32 %v708, %v804
      %v806 = vpop.f32.mrb[0].mxu0
      %v807 = vpop.f32.mrb[0].mxu0
      %v808 = vadd.f32 %v711, %v807
      %v809 = vpop.f32.mrb[0].mxu0
      %810 = vdwg.mxu0
      %v811 = vrot.slane %v749, 1
      %v812 = vrot.slane %v752, 1
      %v813 = vrot.slane %v757, 1
      %v814 = vrot.slane %v760, 1
      %v815 = vrot.slane %v765, 1
      %v816 = vrot.slane %v768, 1
      %v817 = vrot.slane %v773, 1
      %v818 = vrot.slane %v776, 1
      %v819 = vrot.slane %v781, 1
      %v820 = vrot.slane %v784, 1
      %v821 = vrot.slane %v789, 1
      %v822 = vrot.slane %v792, 1
      %v823 = vrot.slane %v797, 1
      %v824 = vrot.slane %v800, 1
      %v825 = vrot.slane %v805, 1
      %v826 = vrot.slane %v808, 1
      %v827 = vlaneseq
      %v828 = vshrl.u32 %v827, 7
      %vm829 = vcmp.lt.s32.totalorder %v828, 7
      %v830 = vsel %vm829, %v825, %v826
      %v831 = vsel %vm829, %v824, %v825
      %v832 = vsel %vm829, %v823, %v824
      %v833 = vsel %vm829, %v822, %v823
      %v834 = vsel %vm829, %v821, %v822
      %v835 = vsel %vm829, %v820, %v821
      %v836 = vsel %vm829, %v819, %v820
      %v837 = vsel %vm829, %v818, %v819
      %v838 = vsel %vm829, %v817, %v818
      %v839 = vsel %vm829, %v816, %v817
      %v840 = vsel %vm829, %v815, %v816
      %v841 = vsel %vm829, %v814, %v815
      %v842 = vsel %vm829, %v813, %v814
      %v843 = vsel %vm829, %v812, %v813
      %v844 = vsel %vm829, %v811, %v812
      %v845 = vsel %vm829, %v826, %v811
      %v894 = vunpack.c.l.b16 %v248
      %v895 = vunpack.c.l.b16 %v249
      %v896 = vunpack.c.l.b16 %v250
      %v897 = vunpack.c.l.b16 %v251
      %v898 = vunpack.c.l.b16 %v252
      %v899 = vunpack.c.l.b16 %v253
      %v900 = vunpack.c.l.b16 %v254
      %v901 = vunpack.c.l.b16 %v255
      %v902 = vunpack.c.l.b16 %v256
      %v903 = vunpack.c.l.b16 %v257
      %v904 = vunpack.c.l.b16 %v258
      %v905 = vunpack.c.l.b16 %v259
      %v906 = vunpack.c.l.b16 %v260
      %v907 = vunpack.c.l.b16 %v261
      %v908 = vunpack.c.l.b16 %v262
      %v909 = vunpack.c.l.b16 %v263
      %v910 = vunpack.c.l.b16 %v264
      %v911 = vunpack.c.l.b16 %v265
      %v912 = vunpack.c.l.b16 %v266
      %v913 = vunpack.c.l.b16 %v267
      %v914 = vunpack.c.l.b16 %v268
      %v915 = vunpack.c.l.b16 %v269
      %v916 = vunpack.c.l.b16 %v270
      %v917 = vunpack.c.l.b16 %v271
      %v918 = vunpack.c.l.b16 %v272
      %v919 = vunpack.c.l.b16 %v273
      %v920 = vunpack.c.l.b16 %v274
      %v921 = vunpack.c.l.b16 %v275
      %v922 = vunpack.c.l.b16 %v276
      %v923 = vunpack.c.l.b16 %v277
      %v924 = vunpack.c.l.b16 %v278
      %v925 = vunpack.c.l.b16 %v279
      %v926 = vunpack.c.l.b16 %v280
      %v927 = vunpack.c.l.b16 %v281
      %v928 = vunpack.c.l.b16 %v282
      %v929 = vunpack.c.l.b16 %v283
      %v930 = vunpack.c.l.b16 %v284
      %v931 = vunpack.c.l.b16 %v285
      %v932 = vunpack.c.l.b16 %v286
      %v933 = vunpack.c.l.b16 %v287
      %v934 = vunpack.c.l.b16 %v288
      %v935 = vunpack.c.l.b16 %v289
      %v936 = vunpack.c.l.b16 %v290
      %v937 = vunpack.c.l.b16 %v291
      %v938 = vunpack.c.l.b16 %v292
      %v939 = vunpack.c.l.b16 %v293
      %v940 = vunpack.c.l.b16 %v294
      %v941 = vunpack.c.l.b16 %v295
      %v942 = vpack.c.b16 %v895, %v894
      %v943 = vpack.c.b16 %v897, %v896
      %v944 = vpack.c.b16 %v899, %v898
      %v945 = vpack.c.b16 %v901, %v900
      %v946 = vpack.c.b16 %v903, %v902
      %v947 = vpack.c.b16 %v905, %v904
      %v948 = vpack.c.b16 %v907, %v906
      %v949 = vpack.c.b16 %v909, %v908
      %v950 = vpack.c.b16 %v911, %v910
      %v951 = vpack.c.b16 %v913, %v912
      %v952 = vpack.c.b16 %v915, %v914
      %v953 = vpack.c.b16 %v917, %v916
      %v954 = vpack.c.b16 %v919, %v918
      %v955 = vpack.c.b16 %v921, %v920
      %v956 = vpack.c.b16 %v923, %v922
      %v957 = vpack.c.b16 %v925, %v924
      %v958 = vpack.c.b16 %v927, %v926
      %v959 = vpack.c.b16 %v929, %v928
      %v960 = vpack.c.b16 %v931, %v930
      %v961 = vpack.c.b16 %v933, %v932
      %v962 = vpack.c.b16 %v935, %v934
      %v963 = vpack.c.b16 %v937, %v936
      %v964 = vpack.c.b16 %v939, %v938
      %v965 = vpack.c.b16 %v941, %v940
      %990 = vmatprep.subr.bf16.mxu0 0
      %991 = vmatpush1.bf16.msra.mxu0 %v942
      %992 = vmatprep.subr.bf16.mxu0 0
      %993 = vmatpush1.bf16.msra.mxu0 %v943
      %994 = vmatprep.subr.bf16.mxu0 0
      %995 = vmatpush1.bf16.msra.mxu0 %v944
      %996 = vmatprep.subr.bf16.mxu0 0
      %997 = vmatpush1.bf16.msra.mxu0 %v945
      %998 = vmatprep.subr.bf16.mxu0 0
      %999 = vmatpush1.bf16.msra.mxu0 %v946
      %1000 = vmatprep.subr.bf16.mxu0 0
      %1001 = vmatpush1.bf16.msra.mxu0 %v947
      %1002 = vmatprep.subr.bf16.mxu0 0
      %1003 = vmatpush1.bf16.msra.mxu0 %v948
      %1004 = vmatprep.subr.bf16.mxu0 0
      %1005 = vmatpush1.bf16.msra.mxu0 %v949
      %1006 = vmatprep.subr.bf16.mxu0 0
      %1007 = vmatpush1.bf16.msra.mxu0 %v950
      %1008 = vmatprep.subr.bf16.mxu0 0
      %1009 = vmatpush1.bf16.msra.mxu0 %v951
      %1010 = vmatprep.subr.bf16.mxu0 0
      %1011 = vmatpush1.bf16.msra.mxu0 %v952
      %1012 = vmatprep.subr.bf16.mxu0 0
      %1013 = vmatpush1.bf16.msra.mxu0 %v953
      %1014 = vmatprep.subr.bf16.mxu0 0
      %1015 = vmatpush1.bf16.msra.mxu0 %v954
      %1016 = vmatprep.subr.bf16.mxu0 0
      %1017 = vmatpush1.bf16.msra.mxu0 %v955
      %1018 = vmatprep.subr.bf16.mxu0 0
      %1019 = vmatpush1.bf16.msra.mxu0 %v956
      %1020 = vmatprep.subr.bf16.mxu0 0
      %1021 = vmatpush1.bf16.msra.mxu0 %v957
      %1022 = vmatprep.mubr.bf16.mxu0 %v426
      %1023 = vmatmul.mubr.bf16.gmra.mrb[0].mxu0 %v425
      %v1024 = vpop.f32.mrb[0].mxu0
      %v1025 = vadd.f32 %v844, %v1024
      %v1026 = vpop.f32.mrb[0].mxu0
      %v1027 = vpop.f32.mrb[0].mxu0
      %v1028 = vadd.f32 %v843, %v1027
      %v1029 = vpop.f32.mrb[0].mxu0
      %1030 = vmatprep.mubr.bf16.mxu0 %v429
      %1031 = vmatmul.mubr.bf16.gmra.mrb[0].mxu0 %v428
      %v1032 = vpop.f32.mrb[0].mxu0
      %v1033 = vadd.f32 %v842, %v1032
      %v1034 = vpop.f32.mrb[0].mxu0
      %v1035 = vpop.f32.mrb[0].mxu0
      %v1036 = vadd.f32 %v841, %v1035
      %v1037 = vpop.f32.mrb[0].mxu0
      %1038 = vmatprep.mubr.bf16.mxu0 %v432
      %1039 = vmatmul.mubr.bf16.gmra.mrb[0].mxu0 %v431
      %v1040 = vpop.f32.mrb[0].mxu0
      %v1041 = vadd.f32 %v840, %v1040
      %v1042 = vpop.f32.mrb[0].mxu0
      %v1043 = vpop.f32.mrb[0].mxu0
      %v1044 = vadd.f32 %v839, %v1043
      %v1045 = vpop.f32.mrb[0].mxu0
      %1046 = vmatprep.mubr.bf16.mxu0 %v435
      %1047 = vmatmul.mubr.bf16.gmra.mrb[0].mxu0 %v434
      %v1048 = vpop.f32.mrb[0].mxu0
      %v1049 = vadd.f32 %v838, %v1048
      %v1050 = vpop.f32.mrb[0].mxu0
      %v1051 = vpop.f32.mrb[0].mxu0
      %v1052 = vadd.f32 %v837, %v1051
      %v1053 = vpop.f32.mrb[0].mxu0
      %1054 = vmatprep.mubr.bf16.mxu0 %v438
      %1055 = vmatmul.mubr.bf16.gmra.mrb[0].mxu0 %v437
      %v1056 = vpop.f32.mrb[0].mxu0
      %v1057 = vadd.f32 %v836, %v1056
      %v1058 = vpop.f32.mrb[0].mxu0
      %v1059 = vpop.f32.mrb[0].mxu0
      %v1060 = vadd.f32 %v835, %v1059
      %v1061 = vpop.f32.mrb[0].mxu0
      %1062 = vmatprep.mubr.bf16.mxu0 %v441
      %1063 = vmatmul.mubr.bf16.gmra.mrb[0].mxu0 %v440
      %v1064 = vpop.f32.mrb[0].mxu0
      %v1065 = vadd.f32 %v834, %v1064
      %v1066 = vpop.f32.mrb[0].mxu0
      %v1067 = vpop.f32.mrb[0].mxu0
      %v1068 = vadd.f32 %v833, %v1067
      %v1069 = vpop.f32.mrb[0].mxu0
      %1070 = vmatprep.mubr.bf16.mxu0 %v444
      %1071 = vmatmul.mubr.bf16.gmra.mrb[0].mxu0 %v443
      %v1072 = vpop.f32.mrb[0].mxu0
      %v1073 = vadd.f32 %v832, %v1072
      %v1074 = vpop.f32.mrb[0].mxu0
      %v1075 = vpop.f32.mrb[0].mxu0
      %v1076 = vadd.f32 %v831, %v1075
      %v1077 = vpop.f32.mrb[0].mxu0
      %1078 = vmatprep.mubr.bf16.mxu0 %v447
      %1079 = vmatmul.mubr.bf16.gmra.mrb[0].mxu0 %v446
      %v1080 = vpop.f32.mrb[0].mxu0
      %v1081 = vadd.f32 %v830, %v1080
      %v1082 = vpop.f32.mrb[0].mxu0
      %v1083 = vpop.f32.mrb[0].mxu0
      %v1084 = vadd.f32 %v845, %v1083
      %v1085 = vpop.f32.mrb[0].mxu0
      %1086 = vdwg.mxu0
      %1087 = vmatprep.subr.bf16.mxu0 0
      %1088 = vmatpush1.bf16.msra.mxu0 %v958
      %1089 = vmatprep.subr.bf16.mxu0 0
      %1090 = vmatpush1.bf16.msra.mxu0 %v959
      %1091 = vmatprep.subr.bf16.mxu0 0
      %1092 = vmatpush1.bf16.msra.mxu0 %v960
      %1093 = vmatprep.subr.bf16.mxu0 0
      %1094 = vmatpush1.bf16.msra.mxu0 %v961
      %1095 = vmatprep.subr.bf16.mxu0 0
      %1096 = vmatpush1.bf16.msra.mxu0 %v962
      %1097 = vmatprep.subr.bf16.mxu0 0
      %1098 = vmatpush1.bf16.msra.mxu0 %v963
      %1099 = vmatprep.subr.bf16.mxu0 0
      %1100 = vmatpush1.bf16.msra.mxu0 %v964
      %1101 = vmatprep.subr.bf16.mxu0 0
      %1102 = vmatpush1.bf16.msra.mxu0 %v965
      %1103 = vmatprep.subr.bf16.mxu0 0
      %1104 = vmatpush1.bf16.msra.mxu0 0
      %1105 = vmatprep.subr.bf16.mxu0 0
      %1106 = vmatpush1.bf16.msra.mxu0 0
      %1107 = vmatprep.subr.bf16.mxu0 0
      %1108 = vmatpush1.bf16.msra.mxu0 0
      %1109 = vmatprep.subr.bf16.mxu0 0
      %1110 = vmatpush1.bf16.msra.mxu0 0
      %1111 = vmatprep.subr.bf16.mxu0 0
      %1112 = vmatpush1.bf16.msra.mxu0 0
      %1113 = vmatprep.subr.bf16.mxu0 0
      %1114 = vmatpush1.bf16.msra.mxu0 0
      %1115 = vmatprep.subr.bf16.mxu0 0
      %1116 = vmatpush1.bf16.msra.mxu0 0
      %1117 = vmatprep.subr.bf16.mxu0 0
      %1118 = vmatpush1.bf16.msra.mxu0 0
      %1119 = vmatprep.mubr.bf16.mxu0 0
      %1120 = vmatmul.mubr.bf16.gmra.mrb[0].mxu0 %v427
      %v1121 = vpop.f32.mrb[0].mxu0
      %v1122 = vadd.f32 %v1025, %v1121
      %v1123 = vpop.f32.mrb[0].mxu0
      %v1124 = vpop.f32.mrb[0].mxu0
      %v1125 = vadd.f32 %v1028, %v1124
      %v1126 = vpop.f32.mrb[0].mxu0
      %1127 = vmatprep.mubr.bf16.mxu0 0
      %1128 = vmatmul.mubr.bf16.gmra.mrb[0].mxu0 %v430
      %v1129 = vpop.f32.mrb[0].mxu0
      %v1130 = vadd.f32 %v1033, %v1129
      %v1131 = vpop.f32.mrb[0].mxu0
      %v1132 = vpop.f32.mrb[0].mxu0
      %v1133 = vadd.f32 %v1036, %v1132
      %v1134 = vpop.f32.mrb[0].mxu0
      %1135 = vmatprep.mubr.bf16.mxu0 0
      %1136 = vmatmul.mubr.bf16.gmra.mrb[0].mxu0 %v433
      %v1137 = vpop.f32.mrb[0].mxu0
      %v1138 = vadd.f32 %v1041, %v1137
      %v1139 = vpop.f32.mrb[0].mxu0
      %v1140 = vpop.f32.mrb[0].mxu0
      %v1141 = vadd.f32 %v1044, %v1140
      %v1142 = vpop.f32.mrb[0].mxu0
      %1143 = vmatprep.mubr.bf16.mxu0 0
      %1144 = vmatmul.mubr.bf16.gmra.mrb[0].mxu0 %v436
      %v1145 = vpop.f32.mrb[0].mxu0
      %v1146 = vadd.f32 %v1049, %v1145
      %v1147 = vpop.f32.mrb[0].mxu0
      %v1148 = vpop.f32.mrb[0].mxu0
      %v1149 = vadd.f32 %v1052, %v1148
      %v1150 = vpop.f32.mrb[0].mxu0
      %1151 = vmatprep.mubr.bf16.mxu0 0
      %1152 = vmatmul.mubr.bf16.gmra.mrb[0].mxu0 %v439
      %v1153 = vpop.f32.mrb[0].mxu0
      %v1154 = vadd.f32 %v1057, %v1153
      %v1155 = vpop.f32.mrb[0].mxu0
      %v1156 = vpop.f32.mrb[0].mxu0
      %v1157 = vadd.f32 %v1060, %v1156
      %v1158 = vpop.f32.mrb[0].mxu0
      %1159 = vmatprep.mubr.bf16.mxu0 0
      %1160 = vmatmul.mubr.bf16.gmra.mrb[0].mxu0 %v442
      %v1161 = vpop.f32.mrb[0].mxu0
      %v1162 = vadd.f32 %v1065, %v1161
      %v1163 = vpop.f32.mrb[0].mxu0
      %v1164 = vpop.f32.mrb[0].mxu0
      %v1165 = vadd.f32 %v1068, %v1164
      %v1166 = vpop.f32.mrb[0].mxu0
      %1167 = vmatprep.mubr.bf16.mxu0 0
      %1168 = vmatmul.mubr.bf16.gmra.mrb[0].mxu0 %v445
      %v1169 = vpop.f32.mrb[0].mxu0
      %v1170 = vadd.f32 %v1073, %v1169
      %v1171 = vpop.f32.mrb[0].mxu0
      %v1172 = vpop.f32.mrb[0].mxu0
      %v1173 = vadd.f32 %v1076, %v1172
      %v1174 = vpop.f32.mrb[0].mxu0
      %1175 = vmatprep.mubr.bf16.mxu0 0
      %1176 = vmatmul.mubr.bf16.gmra.mrb[0].mxu0 %v448
      %v1177 = vpop.f32.mrb[0].mxu0
      %v1178 = vadd.f32 %v1081, %v1177
      %v1179 = vpop.f32.mrb[0].mxu0
      %v1180 = vpop.f32.mrb[0].mxu0
      %v1181 = vadd.f32 %v1084, %v1180
      %v1182 = vpop.f32.mrb[0].mxu0
      %1183 = vdwg.mxu0
      %v1184 = vld [vmem:[%s2] sm:$0x1]
      %v1186 = vlaneseq
      %v1187 = vshrl.u32 %v1186, 7
      %v1188 = vsub.s32 0, %v1187
      %v1189 = vrot.slane %v1184, %v1188
      %v1191 = vadd.f32 %v1122, %v1189
      %v1192 = vadd.f32 %v1125, %v1189
      %v1193 = vadd.f32 %v1130, %v1189
      %v1194 = vadd.f32 %v1133, %v1189
      %v1195 = vadd.f32 %v1138, %v1189
      %v1196 = vadd.f32 %v1141, %v1189
      %v1197 = vadd.f32 %v1146, %v1189
      %v1198 = vadd.f32 %v1149, %v1189
      %v1199 = vadd.f32 %v1154, %v1189
      %v1200 = vadd.f32 %v1157, %v1189
      %v1201 = vadd.f32 %v1162, %v1189
      %v1202 = vadd.f32 %v1165, %v1189
      %v1203 = vadd.f32 %v1170, %v1189
      %v1204 = vadd.f32 %v1173, %v1189
      %v1205 = vadd.f32 %v1178, %v1189
      %v1206 = vadd.f32 %v1181, %v1189
      %v1207 = vmax.f32 %v1191, 0.0
      %v1208 = vmax.f32 %v1192, 0.0
      %v1209 = vmax.f32 %v1193, 0.0
      %v1210 = vmax.f32 %v1194, 0.0
      %v1211 = vmax.f32 %v1195, 0.0
      %v1212 = vmax.f32 %v1196, 0.0
      %v1213 = vmax.f32 %v1197, 0.0
      %v1214 = vmax.f32 %v1198, 0.0
      %v1215 = vmax.f32 %v1199, 0.0
      %v1216 = vmax.f32 %v1200, 0.0
      %v1217 = vmax.f32 %v1201, 0.0
      %v1218 = vmax.f32 %v1202, 0.0
      %v1219 = vmax.f32 %v1203, 0.0
      %v1220 = vmax.f32 %v1204, 0.0
      %v1221 = vmax.f32 %v1205, 0.0
      %v1222 = vmax.f32 %v1206, 0.0
      %1223 = vst [vmem:[%s213] sm:$0xff] %v1207
      %1224 = vst [vmem:[%s213 + $0x8] sm:$0xff] %v1208
      %1225 = vst [vmem:[%s213 + $0x10] sm:$0xff] %v1209
      %1226 = vst [vmem:[%s213 + $0x18] sm:$0xff] %v1210
      %1227 = vst [vmem:[%s213 + $0x20] sm:$0xff] %v1211
      %1228 = vst [vmem:[%s213 + $0x28] sm:$0xff] %v1212
      %1229 = vst [vmem:[%s213 + $0x30] sm:$0xff] %v1213
      %1230 = vst [vmem:[%s213 + $0x38] sm:$0xff] %v1214
      %1231 = vst [vmem:[%s213 + $0x40] sm:$0xff] %v1215
      %1232 = vst [vmem:[%s213 + $0x48] sm:$0xff] %v1216
      %1233 = vst [vmem:[%s213 + $0x50] sm:$0xff] %v1217
      %1234 = vst [vmem:[%s213 + $0x58] sm:$0xff] %v1218
      %1235 = vst [vmem:[%s213 + $0x60] sm:$0xff] %v1219
      %1236 = vst [vmem:[%s213 + $0x68] sm:$0xff] %v1220
      %1237 = vst [vmem:[%s213 + $0x70] sm:$0xff] %v1221
      %1238 = vst [vmem:[%s213 + $0x78] sm:$0xff] %v1222
      %s1239 = smul.u32 8, %s19
      %p1240 = scmp.lt.s32.totalorder %s18, 1
      %s1241 = scalar_select %p1240, %s18, 1
      %p1242 = scmp.lt.s32.totalorder %s1239, 7
      %s1243 = scalar_select %p1242, %s1239, 7
      %s1244 = smul.addr %s1243, 2
      %s1245 = smul.addr %s1241, 16
      %s1246 = sadd.s32 %s1244, %s1245
      %s1247 = smul.addr %s1246, 8
      %s1248 = scalar_lea.vmem %s3, %s1247
      // Predicated region
      $region33: #{downsample_forward.1} parent=31 // pred_check
        %p1249 = pneg %p116
      $region34: #{downsample_forward.1} parent=31 // pred_check_branch
        %1251 = sbr.rel (%p1249) target = $region36
      $region35: #{downsample_forward.1} parent=31 // pred_region
        %s1252 = smul.u32 8, %s19
      $region36: #{downsample_forward.1} parent=31 // pred_fallthru
        _
    $region32: #{downsample_forward.1} parent=5 // pred_fallthru
      _
    %p1253 = scmp.le.s32.totalorder 2, %s9
    // Predicated region
    $region37: #{downsample_forward.1} parent=5 // pred_check
      %p1254 = pneg %p1253
    $region38: #{downsample_forward.1} parent=5 // pred_check_branch
      %1256 = sbr.rel (%p1254) target = $region40
    $region39: #{downsample_forward.1} parent=5 // pred_region
      %s1257 = ssub.s32 %s9, 2
      // Predicated region
      $region41: #{downsample_forward.1} parent=39 // pred_check
        %p1258 = pneg %p122
      $region42: #{downsample_forward.1} parent=39 // pred_check_branch
        %1260 = sbr.rel (%p1258) target = $region44
      $region43: #{downsample_forward.1} parent=39 // pred_region
        %s1261 = smul.u32 8, %s21
        %p1262 = scmp.lt.s32.totalorder %s20, 1
        %s1263 = scalar_select %p1262, %s20, 1
        %p1264 = scmp.lt.s32.totalorder %s1261, 7
        %s1265 = scalar_select %p1264, %s1261, 7
        %s1266 = smul.addr %s1265, 2
        %s1267 = smul.addr %s1263, 16
        %s1268 = sadd.s32 %s1266, %s1267
        %s1269 = smul.addr %s1268, 8
        %s1270 = scalar_lea.vmem %s3, %s1269
      $region44: #{downsample_forward.1} parent=39 // pred_fallthru
        _
    $region40: #{downsample_forward.1} parent=5 // pred_fallthru
      _
  $region6: #{downsample_forward.1} parent=0 // loop_footer
    %s13 = sadd.s32 1, %s9
  $region7: #{downsample_forward.1} parent=0 // loop_footer_branch
    %8 = sbr.rel target = $region3
  $region8: #{downsample_forward.1} parent=0 // loop_exit
    _

</llo_original>
